<compile_context>
chip_gen: v5e
topology: v5e:2x2
jax: 0.10.0
libtpu: 0.0.40
codegen_flags: <defaults>
</compile_context>

<pallas_src>
import functools
import math

import jax
import jax.numpy as jnp
import numpy as np
from jax import lax
from jax.experimental import pallas as pl
from jax.experimental.pallas import tpu as pltpu

_LOG_EPS = math.log(1e-07)


def _jsd_kernel(p1_ref, p2_ref, labels_ref, out_ref, *,
                w0, w1, w2, n_total, tn, tiles_per_core, needs_mask):
    """One (tn, C) batch tile of the fused weighted JS divergence.

    p1_ref, p2_ref : (tn, C) logits (native dtype, VMEM)
    labels_ref     : (tn, 1) int32 class ids (VMEM)
    out_ref        : (1, 1, C) float32 per-core column partial sums
                     (VMEM, resident across the tile axis of the grid)
    """
    core = pl.program_id(0)     # leading "parallel" split (2 TCs on v7x)
    step = pl.program_id(1)     # tile index within this core's range

    @pl.when(step == 0)
    def _():
        out_ref[...] = jnp.zeros_like(out_ref)

    x1 = p1_ref[...].astype(jnp.float32)
    x2 = p2_ref[...].astype(jnp.float32)

    def softmax_and_logsoftmax(x):
        m = jnp.max(x, axis=-1, keepdims=True)
        xs = x - m
        e = jnp.exp(xs)
        s = jnp.sum(e, axis=-1, keepdims=True)
        # s is (tn, 1): only ~1/C of the tile's elements, so the exact
        # (Newton-refined) reciprocal is essentially free; keep full accuracy.
        p = e * pl.reciprocal(s, approx=False)
        logp = xs - jnp.log(s)          # per-row log only (cheap)
        return p, logp

    p1, lp1 = softmax_and_logsoftmax(x1)
    p2, lp2 = softmax_and_logsoftmax(x2)

    rows, ncls = p1.shape
    cls_idx = lax.broadcasted_iota(jnp.int32, (rows, ncls), 1)
    # w0 * one_hot(labels) without materialising the one-hot + cast.
    w_onehot = jnp.where(cls_idx == labels_ref[...],
                         jnp.float32(w0), jnp.float32(0.0))

    mean_d = w_onehot + w1 * p1 + w2 * p2
    m_log = jnp.log(jnp.clip(mean_d, 1e-07, 1.0))     # single full-tile log

    # log(clamp(p, 1e-7)) == max(log_softmax, log 1e-7)   (log is monotone)
    lp1c = jnp.maximum(lp1, jnp.float32(_LOG_EPS))
    lp2c = jnp.maximum(lp2, jnp.float32(_LOG_EPS))

    # Fused integrand of the three weighted KL terms (one-hot self-entropy = 0,
    # the reference's where-masks are numerically redundant here).
    loss = -mean_d * m_log + w1 * (p1 * lp1c) + w2 * (p2 * lp2c)

    if needs_mask:
        # Mask rows of the partial last tile and of duplicated (clamped) tiles.
        tile_idx = core * tiles_per_core + step
        row_idx = tile_idx * tn + lax.broadcasted_iota(jnp.int32, (rows, 1), 0)
        loss = jnp.where(row_idx < n_total, loss, 0.0)

    # Per-step accumulation: column sums added into the resident VMEM output
    # block (no lane reduce, no SMEM scalar read-modify-write per step).
    out_ref[...] += jnp.sum(loss, axis=0, keepdims=True)[None]


def _vmem_capacity_bytes():
    try:
        info = pltpu.get_tpu_info()
        cap = getattr(info, "vmem_capacity_bytes", None)
        if cap:
            return int(cap)
    except Exception:
        pass
    return 64 * 1024 * 1024      # conservative: v7x per-core VMEM


def _select_row_tile(n, c, itemsize, vmem_budget_bytes, block_rows=None):
    """Row-tile size: multiple of 64 (safe for f32/bf16) or the full batch."""
    if block_rows is None:
        # Per-row VMEM footprint: double-buffered logits blocks for both
        # inputs, the lane-padded (x128) labels block (double-buffered), and
        # ~10 live full-tile f32 temporaries inside the kernel.
        per_row = 2 * 2 * c * itemsize + 2 * 128 * 4 + 10 * c * 4
        tn_budget = vmem_budget_bytes // per_row
        tn_target = (2 << 20) // max(1, c * itemsize)     # ~2 MiB / logits block
        tn = int(min(tn_budget, tn_target, 8192))
    else:
        tn = int(block_rows)
    if tn >= n:
        return n
    return max(64, (tn // 64) * 64)


def jsd_weighted_custom(pred1, pred2, labels, *, weights=0.5, num_classes=None,
                        block_rows=None):
    """JAX/Pallas equivalent of JensenShannonDivergenceWeightedCustom.forward
    with pred = [pred1, pred2] (two logit tensors of shape (N, C))."""
    w0 = float(weights)
    w1 = (1.0 - w0) / 2.0
    w2 = (1.0 - w0) / 2.0
    assert abs(1.0 - (w0 + w1 + w2)) < 1e-3

    n, c = pred1.shape
    assert pred2.shape == (n, c)
    if num_classes is not None:
        assert num_classes == c
    labels2d = labels.reshape(n, 1).astype(jnp.int32)
    itemsize = jnp.dtype(pred1.dtype).itemsize

    vmem_cap = _vmem_capacity_bytes()
    vmem_budget = int(vmem_cap * 0.40)
    vmem_limit = max(int(vmem_cap * 0.45), 32 * 1024 * 1024)

    tn = _select_row_tile(n, c, itemsize, vmem_budget, block_rows)
    num_tiles = pl.cdiv(n, tn)
    # Leading "parallel" split: 2-way for v7x megacore; harmless on 1-TC chips.
    num_splits = 2 if num_tiles >= 2 else 1
    tiles_per_core = pl.cdiv(num_tiles, num_splits)
    needs_mask = (num_tiles * tn != n) or (num_splits * tiles_per_core != num_tiles)

    def block_index(core, step):
        # Clamp so duplicated trailing tiles (odd tile counts) stay in bounds;
        # their rows are masked out inside the kernel.
        t = jnp.minimum(core * tiles_per_core + step, num_tiles - 1)
        return (t, 0)

    kernel = functools.partial(
        _jsd_kernel, w0=w0, w1=w1, w2=w2, n_total=n, tn=tn,
        tiles_per_core=tiles_per_core, needs_mask=needs_mask)

    cost = pl.CostEstimate(
        flops=int(20 * n * c),
        transcendentals=int(3 * n * c + 4 * n),
        bytes_accessed=int(2 * n * c * itemsize + 4 * n + 4 * num_splits * c))

    partials = pl.pallas_call(
        kernel,
        out_shape=jax.ShapeDtypeStruct((num_splits, 1, c), jnp.float32),
        grid=(num_splits, tiles_per_core),
        in_specs=[
            pl.BlockSpec((tn, c), block_index),
            pl.BlockSpec((tn, c), block_index),
            pl.BlockSpec((tn, 1), block_index),
        ],
        out_specs=pl.BlockSpec((1, 1, c), lambda core, step: (core, 0, 0)),
        compiler_params=pltpu.CompilerParams(
            dimension_semantics=("parallel", "arbitrary"),
            vmem_limit_bytes=vmem_limit),
        cost_estimate=cost,
    )(pred1, pred2, labels2d)

    return jnp.sum(partials) / n


def _jsd_reference(pred1, pred2, labels, *, weights=0.5):
    """Pure-JAX reference mirroring the PyTorch module (f32 math)."""
    w = [weights, (1.0 - weights) / 2.0, (1.0 - weights) / 2.0]
    p1 = jax.nn.softmax(pred1.astype(jnp.float32), axis=1)
    p2 = jax.nn.softmax(pred2.astype(jnp.float32), axis=1)
    onehot = jax.nn.one_hot(labels, pred1.shape[1], dtype=jnp.float32)
    distribs = [onehot, p1, p2]
    mean_d = sum(wi * d for wi, d in zip(w, distribs))
    m_log = jnp.log(jnp.clip(mean_d, 1e-07, 1.0))

    def kl(pred_log, tgt):
        out = tgt * (jnp.log(jnp.maximum(tgt, 1e-07)) - pred_log)
        out = jnp.where(tgt > 0, out, 0.0)
        return jnp.mean(jnp.sum(out, axis=1))

    return sum(wi * kl(m_log, d) for wi, d in zip(w, distribs))


if __name__ == "__main__":
    # Synthetic deterministic inputs. Module init params:
    #   weights=0.5, lamb/num unused by forward, num_classes=C.
    key = jax.random.PRNGKey(0)
    keys = jax.random.split(key, 9)

    # Test 1: small canonical shape (single tile, auto tile selection).
    N, C = 8, 32
    pred1 = jax.random.normal(keys[0], (N, C), dtype=jnp.float32)
    pred2 = jax.random.normal(keys[1], (N, C), dtype=jnp.float32)
    labels = jax.random.randint(keys[2], (N,), 0, C, dtype=jnp.int32)
    loss = jax.block_until_ready(
        jsd_weighted_custom(pred1, pred2, labels, weights=0.5, num_classes=C))
    ref = jax.block_until_ready(_jsd_reference(pred1, pred2, labels, weights=0.5))
    assert np.allclose(np.asarray(loss), np.asarray(ref), rtol=1e-5, atol=1e-5), (
        float(loss), float(ref))

    # Test 2: odd tile count + partial last tile -> uneven 2-way split with a
    # clamped duplicate tile and row masking.
    N2, C2 = 300, 32
    pred1b = jax.random.normal(keys[3], (N2, C2), dtype=jnp.float32)
    pred2b = jax.random.normal(keys[4], (N2, C2), dtype=jnp.float32)
    labelsb = jax.random.randint(keys[5], (N2,), 0, C2, dtype=jnp.int32)
    loss2 = jax.block_until_ready(
        jsd_weighted_custom(pred1b, pred2b, labelsb, weights=0.5,
                            num_classes=C2, block_rows=64))
    ref2 = jax.block_until_ready(_jsd_reference(pred1b, pred2b, labelsb, weights=0.5))
    assert np.allclose(np.asarray(loss2), np.asarray(ref2), rtol=1e-5, atol=1e-5), (
        float(loss2), float(ref2))

    # Test 3: evenly divisible tiles -> no-mask fast path, even 2-way split.
    N3, C3 = 256, 32
    pred1c = jax.random.normal(keys[6], (N3, C3), dtype=jnp.float32)
    pred2c = jax.random.normal(keys[7], (N3, C3), dtype=jnp.float32)
    labelsc = jax.random.randint(keys[8], (N3,), 0, C3, dtype=jnp.int32)
    loss3 = jax.block_until_ready(
        jsd_weighted_custom(pred1c, pred2c, labelsc, weights=0.5,
                            num_classes=C3, block_rows=64))
    ref3 = jax.block_until_ready(_jsd_reference(pred1c, pred2c, labelsc, weights=0.5))
    assert np.allclose(np.asarray(loss3), np.asarray(ref3), rtol=1e-5, atol=1e-5), (
        float(loss3), float(ref3))

    print("KERNEL_OK")
</pallas_src>

<mosaic_0001>
module attributes {stable_mosaic.version = 11 : i64} {
  func.func @_jsd_kernel(%arg0: i32, %arg1: i32, %arg2: memref<8x32xf32, #tpu.memory_space<vmem>>, %arg3: memref<8x32xf32, #tpu.memory_space<vmem>>, %arg4: memref<8x1xi32, #tpu.memory_space<vmem>>, %arg5: memref<1x1x32xf32, #tpu.memory_space<vmem>>) attributes {dimension_semantics = [#tpu.dimension_semantics<parallel>, #tpu.dimension_semantics<arbitrary>], iteration_bounds = array<i64: 1, 1>, scalar_prefetch = 0 : i64, scratch_operands = 0 : i64, tpu.core_type = #tpu.core_type<tc>, window_params = [{transform_indices = @transform_0, window_bounds = array<i64: 8, 32>}, {transform_indices = @transform_1, window_bounds = array<i64: 8, 32>}, {transform_indices = @transform_2, window_bounds = array<i64: 8, 1>}, {transform_indices = @transform_3, window_bounds = array<i64: 1, 1, 32>}]} {
    %c0_i32 = arith.constant 0 : i32
    %0 = arith.cmpi eq, %arg1, %c0_i32 : i32
    %1 = arith.extui %0 : i1 to i32
    %c0_i32_0 = arith.constant 0 : i32
    %2 = arith.cmpi ne, %1, %c0_i32_0 : i32
    scf.if %2 {
      %cst_27 = arith.constant 0.000000e+00 : f32
      %70 = vector.broadcast %cst_27 : f32 to vector<1x1x32xf32>
      %c0_28 = arith.constant 0 : index
      %c0_29 = arith.constant 0 : index
      %c0_30 = arith.constant 0 : index
      %71 = vector.load %arg5[%c0_28, %c0_29, %c0_30] : memref<1x1x32xf32, #tpu.memory_space<vmem>>, vector<1x1x32xf32>
      tpu.vector_store %arg5[%c0_28, %c0_29, %c0_30], %70 {strides = array<i32>} : memref<1x1x32xf32, #tpu.memory_space<vmem>>, vector<1x1x32xf32>,
    } else {
    }
    %c0 = arith.constant 0 : index
    %c0_1 = arith.constant 0 : index
    %3 = vector.load %arg2[%c0, %c0_1] : memref<8x32xf32, #tpu.memory_space<vmem>>, vector<8x32xf32>
    %c0_2 = arith.constant 0 : index
    %c0_3 = arith.constant 0 : index
    %4 = vector.load %arg3[%c0_2, %c0_3] : memref<8x32xf32, #tpu.memory_space<vmem>>, vector<8x32xf32>
    %cst = arith.constant dense<0xFF800000> : vector<8xf32>
    %5 = vector.multi_reduction <maximumf>, %3, %cst [1] : vector<8x32xf32> to vector<8xf32>
    %6 = vector.shape_cast %5 : vector<8xf32> to vector<8x1xf32>
    %7 = vector.broadcast %6 : vector<8x1xf32> to vector<8x32xf32>
    %8 = arith.subf %3, %7 : vector<8x32xf32>
    %9 = math.exp %8 : vector<8x32xf32>
    %cst_4 = arith.constant dense<0.000000e+00> : vector<8xf32>
    %10 = vector.multi_reduction <add>, %9, %cst_4 [1] : vector<8x32xf32> to vector<8xf32>
    %11 = vector.shape_cast %10 : vector<8xf32> to vector<8x1xf32>
    %12 = tpu.reciprocal %11 : vector<8x1xf32> -> vector<8x1xf32>
    %13 = vector.broadcast %12 : vector<8x1xf32> to vector<8x32xf32>
    %14 = arith.mulf %9, %13 : vector<8x32xf32>
    %15 = math.log %11 : vector<8x1xf32>
    %16 = vector.broadcast %15 : vector<8x1xf32> to vector<8x32xf32>
    %17 = arith.subf %8, %16 : vector<8x32xf32>
    %cst_5 = arith.constant dense<0xFF800000> : vector<8xf32>
    %18 = vector.multi_reduction <maximumf>, %4, %cst_5 [1] : vector<8x32xf32> to vector<8xf32>
    %19 = vector.shape_cast %18 : vector<8xf32> to vector<8x1xf32>
    %20 = vector.broadcast %19 : vector<8x1xf32> to vector<8x32xf32>
    %21 = arith.subf %4, %20 : vector<8x32xf32>
    %22 = math.exp %21 : vector<8x32xf32>
    %cst_6 = arith.constant dense<0.000000e+00> : vector<8xf32>
    %23 = vector.multi_reduction <add>, %22, %cst_6 [1] : vector<8x32xf32> to vector<8xf32>
    %24 = vector.shape_cast %23 : vector<8xf32> to vector<8x1xf32>
    %25 = tpu.reciprocal %24 : vector<8x1xf32> -> vector<8x1xf32>
    %26 = vector.broadcast %25 : vector<8x1xf32> to vector<8x32xf32>
    %27 = arith.mulf %22, %26 : vector<8x32xf32>
    %28 = math.log %24 : vector<8x1xf32>
    %29 = vector.broadcast %28 : vector<8x1xf32> to vector<8x32xf32>
    %30 = arith.subf %21, %29 : vector<8x32xf32>
    %31 = tpu.iota {dimensions = array<i32: 1>} : vector<8x32xi32>
    %c0_7 = arith.constant 0 : index
    %c0_8 = arith.constant 0 : index
    %32 = vector.load %arg4[%c0_7, %c0_8] : memref<8x1xi32, #tpu.memory_space<vmem>>, vector<8x1xi32>
    %33 = vector.broadcast %32 : vector<8x1xi32> to vector<8x32xi32>
    %34 = arith.cmpi eq, %31, %33 : vector<8x32xi32>
    %cst_9 = arith.constant 5.000000e-01 : f32
    %cst_10 = arith.constant 0.000000e+00 : f32
    %35 = vector.broadcast %cst_9 : f32 to vector<8x32xf32>
    %36 = vector.broadcast %cst_10 : f32 to vector<8x32xf32>
    %37 = arith.select %34, %35, %36 : vector<8x32xi1>, vector<8x32xf32>
    %cst_11 = arith.constant 2.500000e-01 : f32
    %38 = vector.broadcast %cst_11 : f32 to vector<8x32xf32>
    %39 = arith.mulf %38, %14 : vector<8x32xf32>
    %40 = arith.addf %37, %39 : vector<8x32xf32>
    %cst_12 = arith.constant 2.500000e-01 : f32
    %41 = vector.broadcast %cst_12 : f32 to vector<8x32xf32>
    %42 = arith.mulf %41, %27 : vector<8x32xf32>
    %43 = arith.addf %40, %42 : vector<8x32xf32>
    %cst_13 = arith.constant 1.000000e-07 : f32
    %cst_14 = arith.constant 1.000000e+00 : f32
    %44 = vector.broadcast %cst_13 : f32 to vector<8x32xf32>
    %45 = arith.maximumf %44, %43 : vector<8x32xf32>
    %46 = vector.broadcast %cst_14 : f32 to vector<8x32xf32>
    %47 = arith.minimumf %46, %45 : vector<8x32xf32>
    %48 = math.log %47 : vector<8x32xf32>
    %cst_15 = arith.constant -16.1180954 : f32
    %49 = vector.broadcast %cst_15 : f32 to vector<8x32xf32>
    %50 = arith.maximumf %17, %49 : vector<8x32xf32>
    %cst_16 = arith.constant -16.1180954 : f32
    %51 = vector.broadcast %cst_16 : f32 to vector<8x32xf32>
    %52 = arith.maximumf %30, %51 : vector<8x32xf32>
    %cst_17 = arith.constant 0.000000e+00 : f32
    %53 = vector.broadcast %cst_17 : f32 to vector<8x32xf32>
    %54 = arith.subf %53, %43 : vector<8x32xf32>
    %55 = arith.mulf %54, %48 : vector<8x32xf32>
    %56 = arith.mulf %14, %50 : vector<8x32xf32>
    %cst_18 = arith.constant 2.500000e-01 : f32
    %57 = vector.broadcast %cst_18 : f32 to vector<8x32xf32>
    %58 = arith.mulf %57, %56 : vector<8x32xf32>
    %59 = arith.addf %55, %58 : vector<8x32xf32>
    %60 = arith.mulf %27, %52 : vector<8x32xf32>
    %cst_19 = arith.constant 2.500000e-01 : f32
    %61 = vector.broadcast %cst_19 : f32 to vector<8x32xf32>
    %62 = arith.mulf %61, %60 : vector<8x32xf32>
    %63 = arith.addf %59, %62 : vector<8x32xf32>
    %c0_20 = arith.constant 0 : index
    %c0_21 = arith.constant 0 : index
    %c0_22 = arith.constant 0 : index
    %64 = vector.load %arg5[%c0_20, %c0_21, %c0_22] : memref<1x1x32xf32, #tpu.memory_space<vmem>>, vector<1x1x32xf32>
    %cst_23 = arith.constant dense<0.000000e+00> : vector<32xf32>
    %65 = vector.multi_reduction <add>, %63, %cst_23 [0] : vector<8x32xf32> to vector<32xf32>
    %66 = vector.shape_cast %65 : vector<32xf32> to vector<1x32xf32>
    %67 = vector.shape_cast %66 : vector<1x32xf32> to vector<1x1x32xf32>
    %68 = arith.addf %64, %67 : vector<1x1x32xf32>
    %c0_24 = arith.constant 0 : index
    %c0_25 = arith.constant 0 : index
    %c0_26 = arith.constant 0 : index
    %69 = vector.load %arg5[%c0_24, %c0_25, %c0_26] : memref<1x1x32xf32, #tpu.memory_space<vmem>>, vector<1x1x32xf32>
    tpu.vector_store %arg5[%c0_24, %c0_25, %c0_26], %68 {strides = array<i32>} : memref<1x1x32xf32, #tpu.memory_space<vmem>>, vector<1x1x32xf32>,
    return
  }
  func.func @transform_0(%arg0: i32, %arg1: i32) -> (i32, i32) {
    %c1_i32 = arith.constant 1 : i32
    %0 = arith.muli %arg0, %c1_i32 : i32
    %1 = arith.addi %0, %arg1 : i32
    %c0_i32 = arith.constant 0 : i32
    %2 = arith.minsi %1, %c0_i32 : i32
    %c0_i32_0 = arith.constant 0 : i32
    %c0_i32_1 = arith.constant 0 : i32
    return %2, %c0_i32_0 : i32, i32
  }
  func.func @transform_1(%arg0: i32, %arg1: i32) -> (i32, i32) {
    %c1_i32 = arith.constant 1 : i32
    %0 = arith.muli %arg0, %c1_i32 : i32
    %1 = arith.addi %0, %arg1 : i32
    %c0_i32 = arith.constant 0 : i32
    %2 = arith.minsi %1, %c0_i32 : i32
    %c0_i32_0 = arith.constant 0 : i32
    %c0_i32_1 = arith.constant 0 : i32
    return %2, %c0_i32_0 : i32, i32
  }
  func.func @transform_2(%arg0: i32, %arg1: i32) -> (i32, i32) {
    %c1_i32 = arith.constant 1 : i32
    %0 = arith.muli %arg0, %c1_i32 : i32
    %1 = arith.addi %0, %arg1 : i32
    %c0_i32 = arith.constant 0 : i32
    %2 = arith.minsi %1, %c0_i32 : i32
    %c0_i32_0 = arith.constant 0 : i32
    %c0_i32_1 = arith.constant 0 : i32
    return %2, %c0_i32_0 : i32, i32
  }
  func.func @transform_3(%arg0: i32, %arg1: i32) -> (i32, i32, i32) {
    %c0_i32 = arith.constant 0 : i32
    %c0_i32_0 = arith.constant 0 : i32
    %c0_i32_1 = arith.constant 0 : i32
    return %arg0, %c0_i32, %c0_i32_0 : i32, i32, i32
  }
}

</mosaic_0001>

<llo_original>
// kernel: tpu_custom_call.1
$region0: #{tpu_custom_call.1}
  #allocation0 [shape = 'u32[]', space=smem, size = 0x4, offset = 0x4, fixed_abs, tag = 'smem constant byte address 0x4 - core index']
  #allocation1 [shape = 'u32[72,128]{1,0:T(1,128)}', space=vmem, size = 0x9000, scoped, tag = 'internal scratch']
  %s0 = inlined_call_operand.vmem [shape: f32[8,32], index: 0, kind: input, shape index: {}]
  %s1 = inlined_call_operand.hbm [shape: f32[8,32], index: 1, kind: input, shape index: {}]
  %s2 = inlined_call_operand.vmem [shape: s32[8,1], index: 2, kind: input, shape index: {}]
  %s3 = inlined_call_operand.hbm [shape: f32[1,1,32], index: 3, kind: output, shape index: {}]
  %s4 = sld [smem:[#allocation0]]
  $region30: #{tpu_custom_call.1} parent=0
    _
  %s6 = ssub.s32 1, %s4
  %s7 = scalar_select 0, %s6, %s4
  $region1: #{tpu_custom_call.1} parent=0
    #allocation2 [shape = 'u8[4096]{0}', space=vmem, size = 0x1000, scoped, tag = 'input window, operand 1, single buffered']
    #allocation3 [shape = 's32[1]{0}', space=sflag, size = 0x4, scoped, tag = 'scoped memory for tpu_custom_call.1']
    #allocation4 [shape = 's32[1]{0}', space=sflag, size = 0x4, scoped, tag = 'scoped memory for tpu_custom_call.1']
    #allocation5 [shape = 'u8[512]{0}', space=vmem, size = 0x400, scoped, tag = 'output window, operand 0, single buffered']
    %8 = vsyncpa [#allocation3], 0
    %9 = vsyncpa [#allocation4], 0
    // Predicated region
    $region2: #{tpu_custom_call.1} parent=1 // pred_check
      _
    $region3: #{tpu_custom_call.1} parent=1 // pred_check_branch
      %11 = sbr.rel (0) target = $region5
    $region4: #{tpu_custom_call.1} parent=1 // pred_region
      %s12 = sadd.s32 0, 0
      %p13 = scmp.lt.s32.totalorder %s12, 0
      %s14 = scalar_select %p13, %s12, 0
      %p15 = scmp.lt.s32.totalorder %s14, 0
      %s16 = scalar_select %p15, %s14, 0
      %s17 = smul.addr %s16, 8
      %s18 = scalar_lea.vmem %s0, %s17
      %s19 = sadd.s32 0, 0
      %p20 = scmp.lt.s32.totalorder %s19, 0
      %s21 = scalar_select %p20, %s19, 0
    $region5: #{tpu_custom_call.1} parent=1 // pred_fallthru
      _
    // Predicated region
    $region6: #{tpu_custom_call.1} parent=1 // pred_check
      _
    $region7: #{tpu_custom_call.1} parent=1 // pred_check_branch
      %23 = sbr.rel (0) target = $region9
    $region8: #{tpu_custom_call.1} parent=1 // pred_region
      %s24 = sadd.s32 0, 0
      %p25 = scmp.lt.s32.totalorder %s24, 0
      %s26 = scalar_select %p25, %s24, 0
      %28 = vsyncadd [#allocation3], 0
      %s29 = smul.addr %s26, 8
      %s30 = scalar_lea.hbm %s1, %s29
      %s32 = sshll.u32 %s30, 4
      %s33 = int_to_ptr.hbm [resolvable:$true] %s32
      %s34 = sshll.u32 [#allocation2], 4
      %s35 = int_to_ptr.vmem [resolvable:$true] %s34
      %37 = dma.hbm_to_vmem [thread:$0]  %s33, 128, %s35, [#allocation3]
    $region9: #{tpu_custom_call.1} parent=1 // pred_fallthru
      _
    // Predicated region
    $region10: #{tpu_custom_call.1} parent=1 // pred_check
      _
    $region11: #{tpu_custom_call.1} parent=1 // pred_check_branch
      %39 = sbr.rel (0) target = $region13
    $region12: #{tpu_custom_call.1} parent=1 // pred_region
      %s40 = sadd.s32 0, 0
      %p41 = scmp.lt.s32.totalorder %s40, 0
      %s42 = scalar_select %p41, %s40, 0
      %p43 = scmp.lt.s32.totalorder %s42, 0
      %s44 = scalar_select %p43, %s42, 0
      %s45 = smul.addr %s44, 8
      %s46 = scalar_lea.vmem %s2, %s45
      %s47 = sadd.s32 0, 0
      %p48 = scmp.lt.s32.totalorder %s47, 0
      %s49 = scalar_select %p48, %s47, 0
    $region13: #{tpu_custom_call.1} parent=1 // pred_fallthru
      _
    // Predicated region
    $region14: #{tpu_custom_call.1} parent=1 // pred_check
      _
    $region15: #{tpu_custom_call.1} parent=1 // pred_check_branch
      %51 = sbr.rel (0) target = $region17
    $region16: #{tpu_custom_call.1} parent=1 // pred_region
      %53 = dma.done [#allocation3], 128
    $region17: #{tpu_custom_call.1} parent=1 // pred_fallthru
      _
    %s54 = sadd.s32 0, 0
    %p55 = scmp.lt.s32.totalorder %s54, 0
    %s56 = scalar_select %p55, %s54, 0
    %p57 = scmp.lt.s32.totalorder %s56, 0
    %s58 = scalar_select %p57, %s56, 0
    %s59 = smul.addr %s58, 8
    %s60 = scalar_lea.vmem %s0, %s59
    %s61 = sadd.s32 0, 0
    %p62 = scmp.lt.s32.totalorder %s61, 0
    %s63 = scalar_select %p62, %s61, 0
    %p64 = scmp.lt.s32.totalorder %s63, 0
    %s65 = scalar_select %p64, %s63, 0
    %s66 = smul.addr %s65, 8
    %s67 = scalar_lea.vmem %s2, %s66
    %s68 = sadd.s32 0, 0
    %p69 = scmp.lt.s32.totalorder %s68, 0
    %s70 = scalar_select %p69, %s68, 0
    %p71 = scmp.lt.s32.totalorder %s70, 0
    %s72 = scalar_select %p71, %s70, 0
    %s73 = smul.addr %s72, 8
    %s74 = scalar_lea.vmem %s0, %s73
    %s75 = sadd.s32 0, 0
    %p76 = scmp.lt.s32.totalorder %s75, 0
    %s77 = scalar_select %p76, %s75, 0
    %s78 = sadd.s32 0, 0
    %p79 = scmp.lt.s32.totalorder %s78, 0
    %s80 = scalar_select %p79, %s78, 0
    %s81 = sadd.s32 0, 0
    %p82 = scmp.lt.s32.totalorder %s81, 0
    %s83 = scalar_select %p82, %s81, 0
    %p84 = scmp.lt.s32.totalorder %s83, 0
    %s85 = scalar_select %p84, %s83, 0
    %s86 = smul.addr %s85, 8
    %s87 = scalar_lea.vmem %s2, %s86
    %s88 = sadd.s32 0, 0
    %p89 = scmp.lt.s32.totalorder %s88, 0
    %s90 = scalar_select %p89, %s88, 0
    %p91 = scmp.eq.s32.totalorder 0, 0
    // Predicated region
    $region18: #{tpu_custom_call.1} parent=1 // pred_check
      %p92 = pneg %p91
    $region19: #{tpu_custom_call.1} parent=1 // pred_check_branch
      %94 = sbr.rel (%p92) target = $region21
    $region20: #{tpu_custom_call.1} parent=1 // pred_region
      %vm95 = vcmask 253952
      %96 = vst.msk [vmem:[#allocation5] sm:$0x1] %vm95, 0.0
    $region21: #{tpu_custom_call.1} parent=1 // pred_fallthru
      _
    %v97 = vld [vmem:[%s74] sm:$0xff]
    %v98 = vld [vmem:[#allocation2] sm:$0xff]
    %vm99 = vcmask 261120
    %v100 = vsel %vm99, %v97, -inf
    %101 = vmax.xlane.f32.xlu0 %v100
    %v102 = vpop.xlane.xlu0 %101
    %v103 = vsub.f32 %v97, %v102
    %v104 = vmul.f32 %v103, 1.442695
    %v105 = vpow.pop %v104
    %v106 = vsel %vm99, %v105, 0.0
    %107 = vadd.xlane.f32.xlu0 %v106
    %v108 = vpop.xlane.xlu0 %107
    %v109 = vrcp.pop %v108
    %v110 = vmul.f32 %v108, %v109
    %v111 = vsub.f32 1.0, %v110
    %v112 = vmul.f32 %v109, %v111
    %v113 = vadd.f32 %v109, %v112
    %vm114 = vweird.f32 %v108
    %vm115 = vweird.f32 %v109
    %vm116 = vmor %vm114, %vm115
    %v117 = vsel %vm116, %v109, %v113
    %v118 = vand.u32 2147483647, %v108
    %vm119 = vcmp.eq.f32.partialorder %v118, 8.507059e+37
    %v120 = vand.u32 %v108, 2147483648
    %v121 = vor.u32 1.1754944e-38, %v120
    %v122 = vsel %vm119, %v121, %v117
    %v123 = vmul.f32 %v105, %v122
    %v124 = vlog2.pop %v108
    %v125 = vmul.f32 %v124, 0.6931472
    %v126 = vsub.f32 %v103, %v125
    %v127 = vsel %vm99, %v98, -inf
    %128 = vmax.xlane.f32.xlu0 %v127
    %v129 = vpop.xlane.xlu0 %128
    %v130 = vsub.f32 %v98, %v129
    %v131 = vmul.f32 %v130, 1.442695
    %v132 = vpow.pop %v131
    %v133 = vsel %vm99, %v132, 0.0
    %134 = vadd.xlane.f32.xlu0 %v133
    %v135 = vpop.xlane.xlu0 %134
    %v136 = vrcp.pop %v135
    %v137 = vmul.f32 %v135, %v136
    %v138 = vsub.f32 1.0, %v137
    %v139 = vmul.f32 %v136, %v138
    %v140 = vadd.f32 %v136, %v139
    %vm141 = vweird.f32 %v135
    %vm142 = vweird.f32 %v136
    %vm143 = vmor %vm141, %vm142
    %v144 = vsel %vm143, %v136, %v140
    %v145 = vand.u32 2147483647, %v135
    %vm146 = vcmp.eq.f32.partialorder %v145, 8.507059e+37
    %v147 = vand.u32 %v135, 2147483648
    %v148 = vor.u32 1.1754944e-38, %v147
    %v149 = vsel %vm146, %v148, %v144
    %v150 = vmul.f32 %v132, %v149
    %v151 = vlog2.pop %v135
    %v152 = vmul.f32 %v151, 0.6931472
    %v153 = vsub.f32 %v130, %v152
    %v154 = vlaneseq
    %v155 = vand.u32 %v154, 127
    %v156 = vld [vmem:[%s87] sm:$0xff]
    %157 = vset.pattern.permute.xlu0 0
    %158 = vperm.xlu0 %157, %v156
    %v159 = vpop.permute.xlu0 %158
    %vm160 = vcmp.eq.s32.totalorder %v155, %v159
    %v161 = vsel %vm160, 0.5, 0.0
    %v162 = vmul.f32 %v123, 0.25
    %v163 = vadd.f32 %v161, %v162
    %v164 = vmul.f32 %v150, 0.25
    %v165 = vadd.f32 %v163, %v164
    %v166 = vmax.f32 %v165, 1e-07
    %v167 = vmin.f32 %v166, 1.0
    %v168 = vlog2.pop %v167
    %v169 = vmul.f32 %v168, 0.6931472
    %v170 = vmax.f32 %v126, -16.118095
    %v171 = vmax.f32 %v153, -16.118095
    %v172 = vsub.f32 0.0, %v165
    %v173 = vmul.f32 %v172, %v169
    %v174 = vmul.f32 %v123, %v170
    %v175 = vmul.f32 %v174, 0.25
    %v176 = vadd.f32 %v173, %v175
    %v177 = vmul.f32 %v150, %v171
    %v178 = vmul.f32 %v177, 0.25
    %v179 = vadd.f32 %v176, %v178
    %v180 = vld [vmem:[#allocation5] sm:$0x1]
    %v181 = vsel %vm99, %v179, 0.0
    %v182 = vrot.slane %v181, 4
    %v183 = vadd.f32 %v181, %v182
    %v184 = vrot.slane %v183, 2
    %v185 = vadd.f32 %v183, %v184
    %v186 = vrot.slane %v185, 1
    %v187 = vadd.f32 %v185, %v186
    %v188 = vadd.f32 %v180, %v187
    %vm189 = vcmask 253952
    %190 = vst.msk [vmem:[#allocation5] sm:$0x1] %vm189, %v188
    // Predicated region
    $region22: #{tpu_custom_call.1} parent=1 // pred_check
      _
    $region23: #{tpu_custom_call.1} parent=1 // pred_check_branch
      %192 = sbr.rel (0) target = $region25
    $region24: #{tpu_custom_call.1} parent=1 // pred_region
      %194 = vsyncadd [#allocation4], 0
      %s196 = sshll.u32 [#allocation5], 4
      %s197 = int_to_ptr.vmem [resolvable:$true] %s196
      %s198 = sshll.u32 %s3, 4
      %s199 = int_to_ptr.hbm [resolvable:$true] %s198
      %201 = dma.vmem_to_hbm [thread:$0]  %s197, 16, %s199, [#allocation4]
    $region25: #{tpu_custom_call.1} parent=1 // pred_fallthru
      _
    // Predicated region
    $region26: #{tpu_custom_call.1} parent=1 // pred_check
      _
    $region27: #{tpu_custom_call.1} parent=1 // pred_check_branch
      %203 = sbr.rel (0) target = $region29
    $region28: #{tpu_custom_call.1} parent=1 // pred_region
      %205 = dma.done [#allocation4], 16
    $region29: #{tpu_custom_call.1} parent=1 // pred_fallthru
      _
    %206 = vsyncpa [#allocation3], 1
    %207 = vsyncpa [#allocation4], 1

</llo_original>
